<compile_context>
chip_gen: v7x
topology: tpu7x:2x2x1
jax: 0.10.0
libtpu: 0.0.40
codegen_flags: <defaults>
</compile_context>

<pallas_src>
import functools

import jax
import jax.numpy as jnp
from jax.experimental import pallas as pl
from jax.experimental.pallas import tpu as pltpu


def _round_up(x, m):
    return (x + m - 1) // m * m


# ---------------------------------------------------------------------------
# Pallas kernel:
#   feat  = concat_k onehot(ids[:, k]) @ wte            (gather via MXU)
#   h     = tanh(feat @ W1 + b1)
#   out   = h @ W2 + b2
# The concat @ W1 is computed as a sum over per-token-slot slabs of W1, which
# is mathematically identical and avoids an in-kernel lane concat.
# ---------------------------------------------------------------------------
def _mlp_kernel(ids_ref, wte_ref, w1_ref, b1_ref, w2_ref, b2_ref, o_ref,
                *, block_size, n_embd):
    ids = ids_ref[...]                       # (tile_m, block_size) int32
    wte = wte_ref[...]                       # (V1p, n_embd)        f32
    w1 = w1_ref[...]                         # (block_size*n_embd, Dh_p)
    tm = ids.shape[0]
    v1p = wte.shape[0]
    dh_p = w1.shape[1]

    col = jax.lax.broadcasted_iota(jnp.int32, (tm, v1p), 1)

    acc = jnp.zeros((tm, dh_p), jnp.float32)
    for k in range(block_size):              # static, small (block_size)
        onehot = (ids[:, k:k + 1] == col).astype(jnp.float32)         # (tm, V1p)
        emb = jnp.dot(onehot, wte, preferred_element_type=jnp.float32)  # (tm, n_embd)
        acc = acc + jnp.dot(emb, w1[k * n_embd:(k + 1) * n_embd, :],
                            preferred_element_type=jnp.float32)

    h = jnp.tanh(acc + b1_ref[...])                                    # (tm, Dh_p)
    logits = jnp.dot(h, w2_ref[...], preferred_element_type=jnp.float32) + b2_ref[...]
    o_ref[...] = logits.astype(o_ref.dtype)                            # (tm, Vp)


# ---------------------------------------------------------------------------
# One-time parameter prep: zero-pad lane dims to 128 (done OUTSIDE jit).
# ---------------------------------------------------------------------------
def prepare_params(params):
    """(wte, w1, b1, w2, b2) -> lane-dense, zero-padded versions."""
    wte, w1, b1, w2, b2 = params
    v1, n_embd = wte.shape
    d_in, d_h = w1.shape
    v = w2.shape[1]

    v1_p = _round_up(v1, 8)          # sublane pad for the embedding table
    d_h_p = _round_up(d_h, 128)      # hidden dim -> lane dense
    v_p = _round_up(v, 128)          # vocab dim  -> lane dense output

    wte_p = jnp.pad(wte, ((0, v1_p - v1), (0, 0)))
    w1_p = jnp.pad(w1, ((0, 0), (0, d_h_p - d_h)))
    b1_p = jnp.pad(b1, (0, d_h_p - d_h)).reshape(1, d_h_p)
    w2_p = jnp.pad(w2, ((0, d_h_p - d_h), (0, v_p - v)))
    b2_p = jnp.pad(b2, (0, v_p - v)).reshape(1, v_p)
    return (wte_p, w1_p, b1_p, w2_p, b2_p)


# ---------------------------------------------------------------------------
# Kernel wrapper
# ---------------------------------------------------------------------------
def mlp_logits_pallas(ids, padded_params, *, vocab_size, tile_m=256):
    """ids: (N, block_size) int32 -> logits (N, vocab_size) float32."""
    wte_p, w1_p, b1_p, w2_p, b2_p = padded_params
    n, block_size = ids.shape
    v1_p, n_embd = wte_p.shape
    d_in, d_h_p = w1_p.shape
    v_p = w2_p.shape[1]

    # One big M tile; a single grid step when N is small.
    tile_m = min(tile_m, _round_up(n, 8))
    n_pad = _round_up(n, tile_m)
    ids_p = jnp.pad(ids, ((0, n_pad - n), (0, 0)))  # no-op when n_pad == n

    flops = 2 * n_pad * (block_size * (v1_p * n_embd + n_embd * d_h_p) + d_h_p * v_p)
    bytes_accessed = 4 * (n_pad * block_size + v1_p * n_embd + d_in * d_h_p
                          + d_h_p + d_h_p * v_p + v_p + n_pad * v_p)
    cost = pl.CostEstimate(flops=flops,
                           transcendentals=n_pad * d_h_p,
                           bytes_accessed=bytes_accessed)

    kernel = functools.partial(_mlp_kernel, block_size=block_size, n_embd=n_embd)

    out = pl.pallas_call(
        kernel,
        out_shape=jax.ShapeDtypeStruct((n_pad, v_p), jnp.float32),
        grid_spec=pltpu.PrefetchScalarGridSpec(
            num_scalar_prefetch=0,
            grid=(n_pad // tile_m,),
            in_specs=[
                pl.BlockSpec((tile_m, block_size), lambda i: (i, 0)),  # token ids
                pl.BlockSpec((v1_p, n_embd), lambda i: (0, 0)),        # wte (resident)
                pl.BlockSpec((d_in, d_h_p), lambda i: (0, 0)),         # W1
                pl.BlockSpec((1, d_h_p), lambda i: (0, 0)),            # b1
                # TODO(synk): for real vocab sizes (32k+) add a second grid axis
                # tiling the vocab dim of W2/out and set vmem_limit_bytes (v7x
                # has only 64 MiB VMEM); unnecessary at makemore sizes.
                pl.BlockSpec((d_h_p, v_p), lambda i: (0, 0)),          # W2
                pl.BlockSpec((1, v_p), lambda i: (0, 0)),              # b2
            ],
            out_specs=pl.BlockSpec((tile_m, v_p), lambda i: (i, 0)),
        ),
        compiler_params=pltpu.CompilerParams(
            dimension_semantics=("parallel",)),
        cost_estimate=cost,
    )(ids_p, wte_p, w1_p, b1_p, w2_p, b2_p)

    return out[:n, :vocab_size]


# ---------------------------------------------------------------------------
# Glue: rolled token ids (matches the PyTorch forward loop exactly)
# ---------------------------------------------------------------------------
def build_rolled_ids(idx, block_size, vocab_size):
    """idx: (B, T) int32 -> (B*T, block_size) int32 token ids per position."""
    cols = []
    cur = idx
    for _ in range(block_size):
        cols.append(cur)
        cur = jnp.roll(cur, 1, axis=1)
        cur = cur.at[:, 0].set(vocab_size)   # special <BLANK> token
    ids = jnp.stack(cols, axis=-1)           # (B, T, block_size)
    return ids.reshape(-1, block_size)


def mlp_forward(idx, padded_params, *, block_size, vocab_size):
    """Returns (logits, loss). Mirrors the targets=None branch (loss=None)."""
    b, t = idx.shape
    ids = build_rolled_ids(idx, block_size, vocab_size)           # (B*T, bs) int32
    logits = mlp_logits_pallas(ids, padded_params, vocab_size=vocab_size)
    logits = logits.reshape(b, t, vocab_size)
    # TODO(synk): cross_entropy with ignore_index=-1 (targets path) not implemented.
    return logits, None


# ---------------------------------------------------------------------------
# Deterministic parameter init (shapes from MLP.__init__)
# ---------------------------------------------------------------------------
def init_params(key, *, vocab_size, block_size, n_embd, n_embd2):
    k_wte, k_w1, k_b1, k_w2, k_b2 = jax.random.split(key, 5)
    d_in = block_size * n_embd
    wte = jax.random.normal(k_wte, (vocab_size + 1, n_embd), jnp.float32) * 0.02
    w1 = jax.random.normal(k_w1, (d_in, n_embd2), jnp.float32) * (1.0 / jnp.sqrt(d_in))
    b1 = jax.random.normal(k_b1, (n_embd2,), jnp.float32) * 0.01
    w2 = jax.random.normal(k_w2, (n_embd2, vocab_size), jnp.float32) * (1.0 / jnp.sqrt(n_embd2))
    b2 = jax.random.normal(k_b2, (vocab_size,), jnp.float32) * 0.01
    return (wte, w1, b1, w2, b2)


if __name__ == "__main__":
    # Small config consistent with the module (makemore-style char model).
    vocab_size = 27
    block_size = 3
    n_embd = 16
    n_embd2 = 32
    B, T = 2, 8

    key = jax.random.PRNGKey(0)
    k_params, k_idx = jax.random.split(key)
    params = init_params(k_params, vocab_size=vocab_size, block_size=block_size,
                         n_embd=n_embd, n_embd2=n_embd2)
    idx = jax.random.randint(k_idx, (B, T), 0, vocab_size, dtype=jnp.int32)

    # Pad weights once, outside jit.
    padded_params = jax.tree_util.tree_map(jax.block_until_ready,
                                           prepare_params(params))

    fwd = jax.jit(functools.partial(mlp_forward, block_size=block_size,
                                    vocab_size=vocab_size))
    logits, loss = fwd(idx, padded_params)
    logits = jax.block_until_ready(logits)

    # Pure-JAX reference (original unpadded params, original concat formulation).
    wte, w1, b1, w2, b2 = params
    embs, cur = [], idx
    for _ in range(block_size):
        embs.append(jnp.take(wte, cur, axis=0))
        cur = jnp.roll(cur, 1, axis=1)
        cur = cur.at[:, 0].set(vocab_size)
    feats = jnp.concatenate(embs, axis=-1).reshape(B * T, -1)
    ref = (jnp.tanh(feats @ w1 + b1) @ w2 + b2).reshape(B, T, vocab_size)

    assert logits.shape == (B, T, vocab_size)
    assert loss is None
    assert jnp.allclose(logits, ref, atol=1e-5, rtol=1e-5)

    print("KERNEL_OK")
</pallas_src>

<mosaic_0001>
module attributes {stable_mosaic.version = 11 : i64} {
  func.func @_mlp_kernel(%arg0: i32, %arg1: memref<16x3xi32, #tpu.memory_space<vmem>>, %arg2: memref<32x16xf32, #tpu.memory_space<vmem>>, %arg3: memref<48x128xf32, #tpu.memory_space<vmem>>, %arg4: memref<1x128xf32, #tpu.memory_space<vmem>>, %arg5: memref<128x128xf32, #tpu.memory_space<vmem>>, %arg6: memref<1x128xf32, #tpu.memory_space<vmem>>, %arg7: memref<16x128xf32, #tpu.memory_space<vmem>>) attributes {dimension_semantics = [#tpu.dimension_semantics<parallel>], iteration_bounds = array<i64: 1>, scalar_prefetch = 0 : i64, scratch_operands = 0 : i64, tpu.core_type = #tpu.core_type<tc>, window_params = [{transform_indices = @transform_0, window_bounds = array<i64: 16, 3>}, {pipeline_mode = #tpu.pipeline_mode<synchronous>, transform_indices = @transform_1, window_bounds = array<i64: 32, 16>}, {pipeline_mode = #tpu.pipeline_mode<synchronous>, transform_indices = @transform_2, window_bounds = array<i64: 48, 128>}, {pipeline_mode = #tpu.pipeline_mode<synchronous>, transform_indices = @transform_3, window_bounds = array<i64: 1, 128>}, {pipeline_mode = #tpu.pipeline_mode<synchronous>, transform_indices = @transform_4, window_bounds = array<i64: 128, 128>}, {pipeline_mode = #tpu.pipeline_mode<synchronous>, transform_indices = @transform_5, window_bounds = array<i64: 1, 128>}, {transform_indices = @transform_6, window_bounds = array<i64: 16, 128>}]} {
    %c0 = arith.constant 0 : index
    %c0_0 = arith.constant 0 : index
    %0 = vector.load %arg1[%c0, %c0_0] : memref<16x3xi32, #tpu.memory_space<vmem>>, vector<16x3xi32>
    %c0_1 = arith.constant 0 : index
    %c0_2 = arith.constant 0 : index
    %1 = vector.load %arg2[%c0_1, %c0_2] : memref<32x16xf32, #tpu.memory_space<vmem>>, vector<32x16xf32>
    %c0_3 = arith.constant 0 : index
    %c0_4 = arith.constant 0 : index
    %2 = vector.load %arg3[%c0_3, %c0_4] : memref<48x128xf32, #tpu.memory_space<vmem>>, vector<48x128xf32>
    %3 = tpu.iota {dimensions = array<i32: 1>} : vector<16x32xi32>
    %cst = arith.constant 0.000000e+00 : f32
    %4 = vector.broadcast %cst : f32 to vector<16x128xf32>
    %5 = vector.extract_strided_slice %0 {offsets = [0, 0], sizes = [16, 1], strides = [1, 1]} : vector<16x3xi32> to vector<16x1xi32>
    %6 = vector.broadcast %5 : vector<16x1xi32> to vector<16x32xi32>
    %7 = arith.cmpi eq, %6, %3 : vector<16x32xi32>
    %8 = arith.extui %7 : vector<16x32xi1> to vector<16x32xi32>
    %9 = arith.sitofp %8 : vector<16x32xi32> to vector<16x32xf32>
    %cst_5 = arith.constant dense<0.000000e+00> : vector<16x16xf32>
    %10 = tpu.matmul %9, %1, %cst_5 {dimension_numbers = #tpu.dot_dimension_numbers<[1], [0], [0], [1], [0, 0, 1, 1], [], []>} : vector<16x32xf32>, vector<32x16xf32>, vector<16x16xf32> -> vector<16x16xf32>
    %11 = vector.extract_strided_slice %2 {offsets = [0, 0], sizes = [16, 128], strides = [1, 1]} : vector<48x128xf32> to vector<16x128xf32>
    %cst_6 = arith.constant dense<0.000000e+00> : vector<16x128xf32>
    %12 = tpu.matmul %10, %11, %cst_6 {dimension_numbers = #tpu.dot_dimension_numbers<[1], [0], [0], [1], [0, 0, 1, 1], [], []>} : vector<16x16xf32>, vector<16x128xf32>, vector<16x128xf32> -> vector<16x128xf32>
    %13 = arith.addf %4, %12 : vector<16x128xf32>
    %14 = vector.extract_strided_slice %0 {offsets = [0, 1], sizes = [16, 1], strides = [1, 1]} : vector<16x3xi32> to vector<16x1xi32>
    %15 = vector.broadcast %14 : vector<16x1xi32> to vector<16x32xi32>
    %16 = arith.cmpi eq, %15, %3 : vector<16x32xi32>
    %17 = arith.extui %16 : vector<16x32xi1> to vector<16x32xi32>
    %18 = arith.sitofp %17 : vector<16x32xi32> to vector<16x32xf32>
    %cst_7 = arith.constant dense<0.000000e+00> : vector<16x16xf32>
    %19 = tpu.matmul %18, %1, %cst_7 {dimension_numbers = #tpu.dot_dimension_numbers<[1], [0], [0], [1], [0, 0, 1, 1], [], []>} : vector<16x32xf32>, vector<32x16xf32>, vector<16x16xf32> -> vector<16x16xf32>
    %20 = vector.extract_strided_slice %2 {offsets = [16, 0], sizes = [16, 128], strides = [1, 1]} : vector<48x128xf32> to vector<16x128xf32>
    %cst_8 = arith.constant dense<0.000000e+00> : vector<16x128xf32>
    %21 = tpu.matmul %19, %20, %cst_8 {dimension_numbers = #tpu.dot_dimension_numbers<[1], [0], [0], [1], [0, 0, 1, 1], [], []>} : vector<16x16xf32>, vector<16x128xf32>, vector<16x128xf32> -> vector<16x128xf32>
    %22 = arith.addf %13, %21 : vector<16x128xf32>
    %23 = vector.extract_strided_slice %0 {offsets = [0, 2], sizes = [16, 1], strides = [1, 1]} : vector<16x3xi32> to vector<16x1xi32>
    %24 = vector.broadcast %23 : vector<16x1xi32> to vector<16x32xi32>
    %25 = arith.cmpi eq, %24, %3 : vector<16x32xi32>
    %26 = arith.extui %25 : vector<16x32xi1> to vector<16x32xi32>
    %27 = arith.sitofp %26 : vector<16x32xi32> to vector<16x32xf32>
    %cst_9 = arith.constant dense<0.000000e+00> : vector<16x16xf32>
    %28 = tpu.matmul %27, %1, %cst_9 {dimension_numbers = #tpu.dot_dimension_numbers<[1], [0], [0], [1], [0, 0, 1, 1], [], []>} : vector<16x32xf32>, vector<32x16xf32>, vector<16x16xf32> -> vector<16x16xf32>
    %29 = vector.extract_strided_slice %2 {offsets = [32, 0], sizes = [16, 128], strides = [1, 1]} : vector<48x128xf32> to vector<16x128xf32>
    %cst_10 = arith.constant dense<0.000000e+00> : vector<16x128xf32>
    %30 = tpu.matmul %28, %29, %cst_10 {dimension_numbers = #tpu.dot_dimension_numbers<[1], [0], [0], [1], [0, 0, 1, 1], [], []>} : vector<16x16xf32>, vector<16x128xf32>, vector<16x128xf32> -> vector<16x128xf32>
    %31 = arith.addf %22, %30 : vector<16x128xf32>
    %c0_11 = arith.constant 0 : index
    %c0_12 = arith.constant 0 : index
    %32 = vector.load %arg4[%c0_11, %c0_12] : memref<1x128xf32, #tpu.memory_space<vmem>>, vector<1x128xf32>
    %33 = vector.broadcast %32 : vector<1x128xf32> to vector<16x128xf32>
    %34 = arith.addf %31, %33 : vector<16x128xf32>
    %35 = math.tanh %34 : vector<16x128xf32>
    %c0_13 = arith.constant 0 : index
    %c0_14 = arith.constant 0 : index
    %36 = vector.load %arg5[%c0_13, %c0_14] : memref<128x128xf32, #tpu.memory_space<vmem>>, vector<128x128xf32>
    %cst_15 = arith.constant dense<0.000000e+00> : vector<16x128xf32>
    %37 = tpu.matmul %35, %36, %cst_15 {dimension_numbers = #tpu.dot_dimension_numbers<[1], [0], [0], [1], [0, 0, 1, 1], [], []>} : vector<16x128xf32>, vector<128x128xf32>, vector<16x128xf32> -> vector<16x128xf32>
    %c0_16 = arith.constant 0 : index
    %c0_17 = arith.constant 0 : index
    %38 = vector.load %arg6[%c0_16, %c0_17] : memref<1x128xf32, #tpu.memory_space<vmem>>, vector<1x128xf32>
    %39 = vector.broadcast %38 : vector<1x128xf32> to vector<16x128xf32>
    %40 = arith.addf %37, %39 : vector<16x128xf32>
    %c0_18 = arith.constant 0 : index
    %c0_19 = arith.constant 0 : index
    %41 = vector.load %arg7[%c0_18, %c0_19] : memref<16x128xf32, #tpu.memory_space<vmem>>, vector<16x128xf32>
    tpu.vector_store %arg7[%c0_18, %c0_19], %40 {strides = array<i32>} : memref<16x128xf32, #tpu.memory_space<vmem>>, vector<16x128xf32>,
    return
  }
  func.func @transform_0(%arg0: i32) -> (i32, i32) {
    %c0_i32 = arith.constant 0 : i32
    %c0_i32_0 = arith.constant 0 : i32
    return %arg0, %c0_i32 : i32, i32
  }
  func.func @transform_1(%arg0: i32) -> (i32, i32) {
    %c0_i32 = arith.constant 0 : i32
    %c0_i32_0 = arith.constant 0 : i32
    %c0_i32_1 = arith.constant 0 : i32
    return %c0_i32, %c0_i32_0 : i32, i32
  }
  func.func @transform_2(%arg0: i32) -> (i32, i32) {
    %c0_i32 = arith.constant 0 : i32
    %c0_i32_0 = arith.constant 0 : i32
    %c0_i32_1 = arith.constant 0 : i32
    return %c0_i32, %c0_i32_0 : i32, i32
  }
  func.func @transform_3(%arg0: i32) -> (i32, i32) {
    %c0_i32 = arith.constant 0 : i32
    %c0_i32_0 = arith.constant 0 : i32
    %c0_i32_1 = arith.constant 0 : i32
    return %c0_i32, %c0_i32_0 : i32, i32
  }
  func.func @transform_4(%arg0: i32) -> (i32, i32) {
    %c0_i32 = arith.constant 0 : i32
    %c0_i32_0 = arith.constant 0 : i32
    %c0_i32_1 = arith.constant 0 : i32
    return %c0_i32, %c0_i32_0 : i32, i32
  }
  func.func @transform_5(%arg0: i32) -> (i32, i32) {
    %c0_i32 = arith.constant 0 : i32
    %c0_i32_0 = arith.constant 0 : i32
    %c0_i32_1 = arith.constant 0 : i32
    return %c0_i32, %c0_i32_0 : i32, i32
  }
  func.func @transform_6(%arg0: i32) -> (i32, i32) {
    %c0_i32 = arith.constant 0 : i32
    %c0_i32_0 = arith.constant 0 : i32
    return %arg0, %c0_i32 : i32, i32
  }
}

</mosaic_0001>

<llo_original>
// kernel: mlp_forward.1
$region0: #{mlp_forward.1}
  #allocation0 [shape = 'u32[]', space=smem, size = 0x4, offset = 0x4, fixed_abs, tag = 'smem constant byte address 0x4 - core index']
  #allocation1 [shape = 'u32[144,128]{1,0:T(1,128)}', space=vmem, size = 0x12000, scoped, tag = 'internal scratch']
  %s0 = inlined_call_operand.vmem [shape: s32[16,3], index: 0, kind: input, shape index: {}]
  %s1 = inlined_call_operand.vmem [shape: f32[32,16], index: 1, kind: input, shape index: {}]
  %s2 = inlined_call_operand.hbm [shape: f32[48,128], index: 2, kind: input, shape index: {}]
  %s3 = inlined_call_operand.vmem [shape: f32[1,128], index: 3, kind: input, shape index: {}]
  %s4 = inlined_call_operand.vmem [shape: f32[128,128], index: 4, kind: input, shape index: {}]
  %s5 = inlined_call_operand.vmem [shape: f32[1,128], index: 5, kind: input, shape index: {}]
  %s6 = inlined_call_operand.vmem [shape: f32[16,128], index: 6, kind: output, shape index: {}]
  %s7 = sld [smem:[#allocation0]]
  $region38: #{mlp_forward.1} parent=0
    _
  %s9 = ssub.s32 1, %s7
  %s10 = scalar_select 0, %s9, %s7
  $region1: #{mlp_forward.1} parent=0
    #allocation2 [shape = 'u8[24576]{0}', space=vmem, size = 0x6000, scoped, tag = 'input window, operand 2, single buffered']
    #allocation3 [shape = 's32[1]{0}', space=sflag, size = 0x4, scoped, tag = 'scoped memory for mlp_forward.1']
    %11 = vsyncpa [#allocation3], 0
    // Predicated region
    $region2: #{mlp_forward.1} parent=1 // pred_check
      _
    $region3: #{mlp_forward.1} parent=1 // pred_check_branch
      %13 = sbr.rel (0) target = $region5
    $region4: #{mlp_forward.1} parent=1 // pred_region
      _
    $region5: #{mlp_forward.1} parent=1 // pred_fallthru
      _
    // Predicated region
    $region6: #{mlp_forward.1} parent=1 // pred_check
      _
    $region7: #{mlp_forward.1} parent=1 // pred_check_branch
      %15 = sbr.rel (0) target = $region9
    $region8: #{mlp_forward.1} parent=1 // pred_region
      _
    $region9: #{mlp_forward.1} parent=1 // pred_fallthru
      _
    // Predicated region
    $region10: #{mlp_forward.1} parent=1 // pred_check
      _
    $region11: #{mlp_forward.1} parent=1 // pred_check_branch
      %17 = sbr.rel (0) target = $region13
    $region12: #{mlp_forward.1} parent=1 // pred_region
      %s19 = ssub.s32 768, 768
      %20 = vsyncadd [#allocation3], %s19
      %s21 = sshll.u32 [#allocation2], 4
      %s22 = int_to_ptr.vmem [resolvable:$true] %s21
      %27 = dma.hbm_to_vmem [thread:$0]  %s2, 768, %s22, [#allocation3], 128, 128, 8
    $region13: #{mlp_forward.1} parent=1 // pred_fallthru
      _
    // Predicated region
    $region14: #{mlp_forward.1} parent=1 // pred_check
      _
    $region15: #{mlp_forward.1} parent=1 // pred_check_branch
      %29 = sbr.rel (0) target = $region17
    $region16: #{mlp_forward.1} parent=1 // pred_region
      _
    $region17: #{mlp_forward.1} parent=1 // pred_fallthru
      _
    // Predicated region
    $region18: #{mlp_forward.1} parent=1 // pred_check
      _
    $region19: #{mlp_forward.1} parent=1 // pred_check_branch
      %31 = sbr.rel (0) target = $region21
    $region20: #{mlp_forward.1} parent=1 // pred_region
      _
    $region21: #{mlp_forward.1} parent=1 // pred_fallthru
      _
    // Predicated region
    $region22: #{mlp_forward.1} parent=1 // pred_check
      _
    $region23: #{mlp_forward.1} parent=1 // pred_check_branch
      %33 = sbr.rel (0) target = $region25
    $region24: #{mlp_forward.1} parent=1 // pred_region
      _
    $region25: #{mlp_forward.1} parent=1 // pred_fallthru
      _
    // Predicated region
    $region26: #{mlp_forward.1} parent=1 // pred_check
      _
    $region27: #{mlp_forward.1} parent=1 // pred_check_branch
      %35 = sbr.rel (0) target = $region29
    $region28: #{mlp_forward.1} parent=1 // pred_region
      %36 = dma.done [#allocation3], 768
    $region29: #{mlp_forward.1} parent=1 // pred_fallthru
      _
    %v37 = vld [vmem:[%s0] sm:$0xff]
    %v38 = vld [vmem:[%s0 + $0x8] sm:$0xff]
    %v39 = vld [vmem:[%s1] sm:$0xff]
    %v40 = vld [vmem:[%s1 + $0x8] sm:$0xff]
    %v41 = vld [vmem:[%s1 + $0x10] sm:$0xff]
    %v42 = vld [vmem:[%s1 + $0x18] sm:$0xff]
    %v43 = vld [vmem:[#allocation2] sm:$0xff]
    %v44 = vld [vmem:[#allocation2 + $0x8] sm:$0xff]
    %v45 = vld [vmem:[#allocation2 + $0x10] sm:$0xff]
    %v46 = vld [vmem:[#allocation2 + $0x18] sm:$0xff]
    %v47 = vld [vmem:[#allocation2 + $0x20] sm:$0xff]
    %v48 = vld [vmem:[#allocation2 + $0x28] sm:$0xff]
    %v49 = vlaneseq
    %v50 = vand.u32 %v49, 127
    %51 = vset.pattern.permute.xlu0 0
    %52 = vperm.xlu0 %51, %v37
    %v53 = vpop.permute.xlu0 %52
    %54 = vset.pattern.permute.xlu0 0
    %55 = vperm.xlu0 %54, %v38
    %v56 = vpop.permute.xlu0 %55
    %vm57 = vcmp.eq.s32.totalorder %v53, %v50
    %vm58 = vcmp.eq.s32.totalorder %v56, %v50
    %v59 = vsel %vm57, 1, 0
    %v60 = vsel %vm58, 1, 0
    %v61 = vcvt.s32.f32 %v59
    %v62 = vcvt.s32.f32 %v60
    %vm63 = vcmask 261120
    %v65 = vsel %vm63, %v61, 0
    %v68 = vsel %vm63, %v62, 0
    %70 = vmatprep.subr.mxu0 0.0
    %71 = vmatpush1.msra.mxu0 %v39
    %72 = vmatprep.subr.mxu0 0.0
    %73 = vmatpush1.msra.mxu0 %v40
    %74 = vmatprep.subr.mxu0 0.0
    %75 = vmatpush1.msra.mxu0 %v41
    %76 = vmatprep.subr.mxu0 0.0
    %77 = vmatpush1.msra.mxu0 %v42
    %78 = vmatprep.subr.mxu0 0.0
    %79 = vmatpush1.msra.mxu0 0.0
    %80 = vmatprep.subr.mxu0 0.0
    %81 = vmatpush1.msra.mxu0 0.0
    %82 = vmatprep.subr.mxu0 0.0
    %83 = vmatpush1.msra.mxu0 0.0
    %84 = vmatprep.subr.mxu0 0.0
    %85 = vmatpush1.msra.mxu0 0.0
    %86 = vmatprep.subr.mxu0 0.0
    %87 = vmatpush1.msra.mxu0 0.0
    %88 = vmatprep.subr.mxu0 0.0
    %89 = vmatpush1.msra.mxu0 0.0
    %90 = vmatprep.subr.mxu0 0.0
    %91 = vmatpush1.msra.mxu0 0.0
    %92 = vmatprep.subr.mxu0 0.0
    %93 = vmatpush1.msra.mxu0 0.0
    %94 = vmatprep.subr.mxu0 0.0
    %95 = vmatpush1.msra.mxu0 0.0
    %96 = vmatprep.subr.mxu0 0.0
    %97 = vmatpush1.msra.mxu0 0.0
    %98 = vmatprep.subr.mxu0 0.0
    %99 = vmatpush1.msra.mxu0 0.0
    %100 = vmatprep.subr.mxu0 0.0
    %101 = vmatpush1.msra.mxu0 0.0
    %102 = vmatprep.subr.mxu0 0.0
    %103 = vmatpush1.msra.mxu0 0.0
    %104 = vmatprep.subr.mxu0 0.0
    %105 = vmatpush1.msra.mxu0 0.0
    %106 = vmatprep.subr.mxu0 0.0
    %107 = vmatpush1.msra.mxu0 0.0
    %108 = vmatprep.subr.mxu0 0.0
    %109 = vmatpush1.msra.mxu0 0.0
    %110 = vmatprep.subr.mxu0 0.0
    %111 = vmatpush1.msra.mxu0 0.0
    %112 = vmatprep.subr.mxu0 0.0
    %113 = vmatpush1.msra.mxu0 0.0
    %114 = vmatprep.subr.mxu0 0.0
    %115 = vmatpush1.msra.mxu0 0.0
    %116 = vmatprep.subr.mxu0 0.0
    %117 = vmatpush1.msra.mxu0 0.0
    %118 = vmatprep.subr.mxu0 0.0
    %119 = vmatpush1.msra.mxu0 0.0
    %120 = vmatprep.subr.mxu0 0.0
    %121 = vmatpush1.msra.mxu0 0.0
    %122 = vmatprep.subr.mxu0 0.0
    %123 = vmatpush1.msra.mxu0 0.0
    %124 = vmatprep.subr.mxu0 0.0
    %125 = vmatpush1.msra.mxu0 0.0
    %126 = vmatprep.subr.mxu0 0.0
    %127 = vmatpush1.msra.mxu0 0.0
    %128 = vmatprep.subr.mxu0 0.0
    %129 = vmatpush1.msra.mxu0 0.0
    %130 = vmatprep.subr.mxu0 0.0
    %131 = vmatpush1.msra.mxu0 0.0
    %132 = vmatprep.subr.mxu0 0.0
    %133 = vmatpush1.msra.mxu0 0.0
    %134 = vmatprep.mubr.f32.mxu0 0.0
    %135 = vmatmul.mubr.f32.gmra.mrb[0].mxu0 %v65
    %v136 = vpop.f32.mrb[0].mxu0
    %v137 = vadd.f32 0.0, %v136
    %v138 = vpop.f32.mrb[0].mxu0
    %139 = vmatprep.mubr.f32.mxu0 0.0
    %140 = vmatmul.mubr.f32.gmra.mrb[0].mxu0 %v68
    %v141 = vpop.f32.mrb[0].mxu0
    %v142 = vadd.f32 0.0, %v141
    %v143 = vpop.f32.mrb[0].mxu0
    %144 = vdwg.mxu0
    %145 = vset.pattern.permute.xlu0 1
    %146 = vperm.xlu0 %145, %v37
    %v147 = vpop.permute.xlu0 %146
    %148 = vset.pattern.permute.xlu0 1
    %149 = vperm.xlu0 %148, %v38
    %v150 = vpop.permute.xlu0 %149
    %vm151 = vcmp.eq.s32.totalorder %v147, %v50
    %vm152 = vcmp.eq.s32.totalorder %v150, %v50
    %v153 = vsel %vm151, 1, 0
    %v154 = vsel %vm152, 1, 0
    %v155 = vcvt.s32.f32 %v153
    %v156 = vcvt.s32.f32 %v154
    %v158 = vsel %vm63, %v155, 0
    %v161 = vsel %vm63, %v156, 0
    %163 = vmatprep.subr.mxu0 0.0
    %164 = vmatpush1.msra.mxu0 %v39
    %165 = vmatprep.subr.mxu0 0.0
    %166 = vmatpush1.msra.mxu0 %v40
    %167 = vmatprep.subr.mxu0 0.0
    %168 = vmatpush1.msra.mxu0 %v41
    %169 = vmatprep.subr.mxu0 0.0
    %170 = vmatpush1.msra.mxu0 %v42
    %171 = vmatprep.subr.mxu0 0.0
    %172 = vmatpush1.msra.mxu0 0.0
    %173 = vmatprep.subr.mxu0 0.0
    %174 = vmatpush1.msra.mxu0 0.0
    %175 = vmatprep.subr.mxu0 0.0
    %176 = vmatpush1.msra.mxu0 0.0
    %177 = vmatprep.subr.mxu0 0.0
    %178 = vmatpush1.msra.mxu0 0.0
    %179 = vmatprep.subr.mxu0 0.0
    %180 = vmatpush1.msra.mxu0 0.0
    %181 = vmatprep.subr.mxu0 0.0
    %182 = vmatpush1.msra.mxu0 0.0
    %183 = vmatprep.subr.mxu0 0.0
    %184 = vmatpush1.msra.mxu0 0.0
    %185 = vmatprep.subr.mxu0 0.0
    %186 = vmatpush1.msra.mxu0 0.0
    %187 = vmatprep.subr.mxu0 0.0
    %188 = vmatpush1.msra.mxu0 0.0
    %189 = vmatprep.subr.mxu0 0.0
    %190 = vmatpush1.msra.mxu0 0.0
    %191 = vmatprep.subr.mxu0 0.0
    %192 = vmatpush1.msra.mxu0 0.0
    %193 = vmatprep.subr.mxu0 0.0
    %194 = vmatpush1.msra.mxu0 0.0
    %195 = vmatprep.subr.mxu0 0.0
    %196 = vmatpush1.msra.mxu0 0.0
    %197 = vmatprep.subr.mxu0 0.0
    %198 = vmatpush1.msra.mxu0 0.0
    %199 = vmatprep.subr.mxu0 0.0
    %200 = vmatpush1.msra.mxu0 0.0
    %201 = vmatprep.subr.mxu0 0.0
    %202 = vmatpush1.msra.mxu0 0.0
    %203 = vmatprep.subr.mxu0 0.0
    %204 = vmatpush1.msra.mxu0 0.0
    %205 = vmatprep.subr.mxu0 0.0
    %206 = vmatpush1.msra.mxu0 0.0
    %207 = vmatprep.subr.mxu0 0.0
    %208 = vmatpush1.msra.mxu0 0.0
    %209 = vmatprep.subr.mxu0 0.0
    %210 = vmatpush1.msra.mxu0 0.0
    %211 = vmatprep.subr.mxu0 0.0
    %212 = vmatpush1.msra.mxu0 0.0
    %213 = vmatprep.subr.mxu0 0.0
    %214 = vmatpush1.msra.mxu0 0.0
    %215 = vmatprep.subr.mxu0 0.0
    %216 = vmatpush1.msra.mxu0 0.0
    %217 = vmatprep.subr.mxu0 0.0
    %218 = vmatpush1.msra.mxu0 0.0
    %219 = vmatprep.subr.mxu0 0.0
    %220 = vmatpush1.msra.mxu0 0.0
    %221 = vmatprep.subr.mxu0 0.0
    %222 = vmatpush1.msra.mxu0 0.0
    %223 = vmatprep.subr.mxu0 0.0
    %224 = vmatpush1.msra.mxu0 0.0
    %225 = vmatprep.subr.mxu0 0.0
    %226 = vmatpush1.msra.mxu0 0.0
    %227 = vmatprep.mubr.f32.mxu0 0.0
    %228 = vmatmul.mubr.f32.gmra.mrb[0].mxu0 %v158
    %v229 = vpop.f32.mrb[0].mxu0
    %v230 = vadd.f32 0.0, %v229
    %v231 = vpop.f32.mrb[0].mxu0
    %232 = vmatprep.mubr.f32.mxu0 0.0
    %233 = vmatmul.mubr.f32.gmra.mrb[0].mxu0 %v161
    %v234 = vpop.f32.mrb[0].mxu0
    %v235 = vadd.f32 0.0, %v234
    %v236 = vpop.f32.mrb[0].mxu0
    %237 = vdwg.mxu0
    %vm238 = vcmask 130048
    %v240 = vsel %vm238, %v230, 0
    %v243 = vsel %vm238, %v235, 0
    %245 = vmatprep.subr.mxu0 0.0
    %246 = vmatpush1.msra.mxu0 %v45
    %247 = vmatprep.subr.mxu0 0.0
    %248 = vmatpush1.msra.mxu0 %v46
    %249 = vmatprep.subr.mxu0 0.0
    %250 = vmatpush1.msra.mxu0 0.0
    %251 = vmatprep.subr.mxu0 0.0
    %252 = vmatpush1.msra.mxu0 0.0
    %253 = vmatprep.subr.mxu0 0.0
    %254 = vmatpush1.msra.mxu0 0.0
    %255 = vmatprep.subr.mxu0 0.0
    %256 = vmatpush1.msra.mxu0 0.0
    %257 = vmatprep.subr.mxu0 0.0
    %258 = vmatpush1.msra.mxu0 0.0
    %259 = vmatprep.subr.mxu0 0.0
    %260 = vmatpush1.msra.mxu0 0.0
    %261 = vmatprep.subr.mxu0 0.0
    %262 = vmatpush1.msra.mxu0 0.0
    %263 = vmatprep.subr.mxu0 0.0
    %264 = vmatpush1.msra.mxu0 0.0
    %265 = vmatprep.subr.mxu0 0.0
    %266 = vmatpush1.msra.mxu0 0.0
    %267 = vmatprep.subr.mxu0 0.0
    %268 = vmatpush1.msra.mxu0 0.0
    %269 = vmatprep.subr.mxu0 0.0
    %270 = vmatpush1.msra.mxu0 0.0
    %271 = vmatprep.subr.mxu0 0.0
    %272 = vmatpush1.msra.mxu0 0.0
    %273 = vmatprep.subr.mxu0 0.0
    %274 = vmatpush1.msra.mxu0 0.0
    %275 = vmatprep.subr.mxu0 0.0
    %276 = vmatpush1.msra.mxu0 0.0
    %277 = vmatprep.subr.mxu0 0.0
    %278 = vmatpush1.msra.mxu0 0.0
    %279 = vmatprep.subr.mxu0 0.0
    %280 = vmatpush1.msra.mxu0 0.0
    %281 = vmatprep.subr.mxu0 0.0
    %282 = vmatpush1.msra.mxu0 0.0
    %283 = vmatprep.subr.mxu0 0.0
    %284 = vmatpush1.msra.mxu0 0.0
    %285 = vmatprep.subr.mxu0 0.0
    %286 = vmatpush1.msra.mxu0 0.0
    %287 = vmatprep.subr.mxu0 0.0
    %288 = vmatpush1.msra.mxu0 0.0
    %289 = vmatprep.subr.mxu0 0.0
    %290 = vmatpush1.msra.mxu0 0.0
    %291 = vmatprep.subr.mxu0 0.0
    %292 = vmatpush1.msra.mxu0 0.0
    %293 = vmatprep.subr.mxu0 0.0
    %294 = vmatpush1.msra.mxu0 0.0
    %295 = vmatprep.subr.mxu0 0.0
    %296 = vmatpush1.msra.mxu0 0.0
    %297 = vmatprep.subr.mxu0 0.0
    %298 = vmatpush1.msra.mxu0 0.0
    %299 = vmatprep.subr.mxu0 0.0
    %300 = vmatpush1.msra.mxu0 0.0
    %301 = vmatprep.subr.mxu0 0.0
    %302 = vmatpush1.msra.mxu0 0.0
    %303 = vmatprep.subr.mxu0 0.0
    %304 = vmatpush1.msra.mxu0 0.0
    %305 = vmatprep.subr.mxu0 0.0
    %306 = vmatpush1.msra.mxu0 0.0
    %307 = vmatprep.subr.mxu0 0.0
    %308 = vmatpush1.msra.mxu0 0.0
    %309 = vmatprep.mubr.f32.mxu0 0.0
    %310 = vmatmul.mubr.f32.gmra.mrb[0].mxu0 %v240
    %v311 = vpop.f32.mrb[0].mxu0
    %v312 = vadd.f32 0.0, %v311
    %v313 = vpop.f32.mrb[0].mxu0
    %314 = vmatprep.mubr.f32.mxu0 0.0
    %315 = vmatmul.mubr.f32.gmra.mrb[0].mxu0 %v243
    %v316 = vpop.f32.mrb[0].mxu0
    %v317 = vadd.f32 0.0, %v316
    %v318 = vpop.f32.mrb[0].mxu0
    %319 = vdwg.mxu0
    %v321 = vsel %vm238, %v137, 0
    %v324 = vsel %vm238, %v142, 0
    %326 = vmatprep.subr.mxu0 0.0
    %327 = vmatpush1.msra.mxu0 %v43
    %328 = vmatprep.subr.mxu0 0.0
    %329 = vmatpush1.msra.mxu0 %v44
    %330 = vmatprep.subr.mxu0 0.0
    %331 = vmatpush1.msra.mxu0 0.0
    %332 = vmatprep.subr.mxu0 0.0
    %333 = vmatpush1.msra.mxu0 0.0
    %334 = vmatprep.subr.mxu0 0.0
    %335 = vmatpush1.msra.mxu0 0.0
    %336 = vmatprep.subr.mxu0 0.0
    %337 = vmatpush1.msra.mxu0 0.0
    %338 = vmatprep.subr.mxu0 0.0
    %339 = vmatpush1.msra.mxu0 0.0
    %340 = vmatprep.subr.mxu0 0.0
    %341 = vmatpush1.msra.mxu0 0.0
    %342 = vmatprep.subr.mxu0 0.0
    %343 = vmatpush1.msra.mxu0 0.0
    %344 = vmatprep.subr.mxu0 0.0
    %345 = vmatpush1.msra.mxu0 0.0
    %346 = vmatprep.subr.mxu0 0.0
    %347 = vmatpush1.msra.mxu0 0.0
    %348 = vmatprep.subr.mxu0 0.0
    %349 = vmatpush1.msra.mxu0 0.0
    %350 = vmatprep.subr.mxu0 0.0
    %351 = vmatpush1.msra.mxu0 0.0
    %352 = vmatprep.subr.mxu0 0.0
    %353 = vmatpush1.msra.mxu0 0.0
    %354 = vmatprep.subr.mxu0 0.0
    %355 = vmatpush1.msra.mxu0 0.0
    %356 = vmatprep.subr.mxu0 0.0
    %357 = vmatpush1.msra.mxu0 0.0
    %358 = vmatprep.subr.mxu0 0.0
    %359 = vmatpush1.msra.mxu0 0.0
    %360 = vmatprep.subr.mxu0 0.0
    %361 = vmatpush1.msra.mxu0 0.0
    %362 = vmatprep.subr.mxu0 0.0
    %363 = vmatpush1.msra.mxu0 0.0
    %364 = vmatprep.subr.mxu0 0.0
    %365 = vmatpush1.msra.mxu0 0.0
    %366 = vmatprep.subr.mxu0 0.0
    %367 = vmatpush1.msra.mxu0 0.0
    %368 = vmatprep.subr.mxu0 0.0
    %369 = vmatpush1.msra.mxu0 0.0
    %370 = vmatprep.subr.mxu0 0.0
    %371 = vmatpush1.msra.mxu0 0.0
    %372 = vmatprep.subr.mxu0 0.0
    %373 = vmatpush1.msra.mxu0 0.0
    %374 = vmatprep.subr.mxu0 0.0
    %375 = vmatpush1.msra.mxu0 0.0
    %376 = vmatprep.subr.mxu0 0.0
    %377 = vmatpush1.msra.mxu0 0.0
    %378 = vmatprep.subr.mxu0 0.0
    %379 = vmatpush1.msra.mxu0 0.0
    %380 = vmatprep.subr.mxu0 0.0
    %381 = vmatpush1.msra.mxu0 0.0
    %382 = vmatprep.subr.mxu0 0.0
    %383 = vmatpush1.msra.mxu0 0.0
    %384 = vmatprep.subr.mxu0 0.0
    %385 = vmatpush1.msra.mxu0 0.0
    %386 = vmatprep.subr.mxu0 0.0
    %387 = vmatpush1.msra.mxu0 0.0
    %388 = vmatprep.subr.mxu0 0.0
    %389 = vmatpush1.msra.mxu0 0.0
    %390 = vmatprep.mubr.f32.mxu0 0.0
    %391 = vmatmul.mubr.f32.gmra.mrb[0].mxu0 %v321
    %v392 = vpop.f32.mrb[0].mxu0
    %v393 = vadd.f32 %v312, %v392
    %v394 = vpop.f32.mrb[0].mxu0
    %395 = vmatprep.mubr.f32.mxu0 0.0
    %396 = vmatmul.mubr.f32.gmra.mrb[0].mxu0 %v324
    %v397 = vpop.f32.mrb[0].mxu0
    %v398 = vadd.f32 %v317, %v397
    %v399 = vpop.f32.mrb[0].mxu0
    %400 = vdwg.mxu0
    %401 = vset.pattern.permute.xlu0 2
    %402 = vperm.xlu0 %401, %v37
    %v403 = vpop.permute.xlu0 %402
    %404 = vset.pattern.permute.xlu0 2
    %405 = vperm.xlu0 %404, %v38
    %v406 = vpop.permute.xlu0 %405
    %vm407 = vcmp.eq.s32.totalorder %v403, %v50
    %vm408 = vcmp.eq.s32.totalorder %v406, %v50
    %v409 = vsel %vm407, 1, 0
    %v410 = vsel %vm408, 1, 0
    %v411 = vcvt.s32.f32 %v409
    %v412 = vcvt.s32.f32 %v410
    %v414 = vsel %vm63, %v411, 0
    %v417 = vsel %vm63, %v412, 0
    %419 = vmatprep.subr.mxu0 0.0
    %420 = vmatpush1.msra.mxu0 %v39
    %421 = vmatprep.subr.mxu0 0.0
    %422 = vmatpush1.msra.mxu0 %v40
    %423 = vmatprep.subr.mxu0 0.0
    %424 = vmatpush1.msra.mxu0 %v41
    %425 = vmatprep.subr.mxu0 0.0
    %426 = vmatpush1.msra.mxu0 %v42
    %427 = vmatprep.subr.mxu0 0.0
    %428 = vmatpush1.msra.mxu0 0.0
    %429 = vmatprep.subr.mxu0 0.0
    %430 = vmatpush1.msra.mxu0 0.0
    %431 = vmatprep.subr.mxu0 0.0
    %432 = vmatpush1.msra.mxu0 0.0
    %433 = vmatprep.subr.mxu0 0.0
    %434 = vmatpush1.msra.mxu0 0.0
    %435 = vmatprep.subr.mxu0 0.0
    %436 = vmatpush1.msra.mxu0 0.0
    %437 = vmatprep.subr.mxu0 0.0
    %438 = vmatpush1.msra.mxu0 0.0
    %439 = vmatprep.subr.mxu0 0.0
    %440 = vmatpush1.msra.mxu0 0.0
    %441 = vmatprep.subr.mxu0 0.0
    %442 = vmatpush1.msra.mxu0 0.0
    %443 = vmatprep.subr.mxu0 0.0
    %444 = vmatpush1.msra.mxu0 0.0
    %445 = vmatprep.subr.mxu0 0.0
    %446 = vmatpush1.msra.mxu0 0.0
    %447 = vmatprep.subr.mxu0 0.0
    %448 = vmatpush1.msra.mxu0 0.0
    %449 = vmatprep.subr.mxu0 0.0
    %450 = vmatpush1.msra.mxu0 0.0
    %451 = vmatprep.subr.mxu0 0.0
    %452 = vmatpush1.msra.mxu0 0.0
    %453 = vmatprep.subr.mxu0 0.0
    %454 = vmatpush1.msra.mxu0 0.0
    %455 = vmatprep.subr.mxu0 0.0
    %456 = vmatpush1.msra.mxu0 0.0
    %457 = vmatprep.subr.mxu0 0.0
    %458 = vmatpush1.msra.mxu0 0.0
    %459 = vmatprep.subr.mxu0 0.0
    %460 = vmatpush1.msra.mxu0 0.0
    %461 = vmatprep.subr.mxu0 0.0
    %462 = vmatpush1.msra.mxu0 0.0
    %463 = vmatprep.subr.mxu0 0.0
    %464 = vmatpush1.msra.mxu0 0.0
    %465 = vmatprep.subr.mxu0 0.0
    %466 = vmatpush1.msra.mxu0 0.0
    %467 = vmatprep.subr.mxu0 0.0
    %468 = vmatpush1.msra.mxu0 0.0
    %469 = vmatprep.subr.mxu0 0.0
    %470 = vmatpush1.msra.mxu0 0.0
    %471 = vmatprep.subr.mxu0 0.0
    %472 = vmatpush1.msra.mxu0 0.0
    %473 = vmatprep.subr.mxu0 0.0
    %474 = vmatpush1.msra.mxu0 0.0
    %475 = vmatprep.subr.mxu0 0.0
    %476 = vmatpush1.msra.mxu0 0.0
    %477 = vmatprep.subr.mxu0 0.0
    %478 = vmatpush1.msra.mxu0 0.0
    %479 = vmatprep.subr.mxu0 0.0
    %480 = vmatpush1.msra.mxu0 0.0
    %481 = vmatprep.subr.mxu0 0.0
    %482 = vmatpush1.msra.mxu0 0.0
    %483 = vmatprep.mubr.f32.mxu0 0.0
    %484 = vmatmul.mubr.f32.gmra.mrb[0].mxu0 %v414
    %v485 = vpop.f32.mrb[0].mxu0
    %v486 = vadd.f32 0.0, %v485
    %v487 = vpop.f32.mrb[0].mxu0
    %488 = vmatprep.mubr.f32.mxu0 0.0
    %489 = vmatmul.mubr.f32.gmra.mrb[0].mxu0 %v417
    %v490 = vpop.f32.mrb[0].mxu0
    %v491 = vadd.f32 0.0, %v490
    %v492 = vpop.f32.mrb[0].mxu0
    %493 = vdwg.mxu0
    %v495 = vsel %vm238, %v486, 0
    %v498 = vsel %vm238, %v491, 0
    %500 = vmatprep.subr.mxu0 0.0
    %501 = vmatpush1.msra.mxu0 %v47
    %502 = vmatprep.subr.mxu0 0.0
    %503 = vmatpush1.msra.mxu0 %v48
    %504 = vmatprep.subr.mxu0 0.0
    %505 = vmatpush1.msra.mxu0 0.0
    %506 = vmatprep.subr.mxu0 0.0
    %507 = vmatpush1.msra.mxu0 0.0
    %508 = vmatprep.subr.mxu0 0.0
    %509 = vmatpush1.msra.mxu0 0.0
    %510 = vmatprep.subr.mxu0 0.0
    %511 = vmatpush1.msra.mxu0 0.0
    %512 = vmatprep.subr.mxu0 0.0
    %513 = vmatpush1.msra.mxu0 0.0
    %514 = vmatprep.subr.mxu0 0.0
    %515 = vmatpush1.msra.mxu0 0.0
    %516 = vmatprep.subr.mxu0 0.0
    %517 = vmatpush1.msra.mxu0 0.0
    %518 = vmatprep.subr.mxu0 0.0
    %519 = vmatpush1.msra.mxu0 0.0
    %520 = vmatprep.subr.mxu0 0.0
    %521 = vmatpush1.msra.mxu0 0.0
    %522 = vmatprep.subr.mxu0 0.0
    %523 = vmatpush1.msra.mxu0 0.0
    %524 = vmatprep.subr.mxu0 0.0
    %525 = vmatpush1.msra.mxu0 0.0
    %526 = vmatprep.subr.mxu0 0.0
    %527 = vmatpush1.msra.mxu0 0.0
    %528 = vmatprep.subr.mxu0 0.0
    %529 = vmatpush1.msra.mxu0 0.0
    %530 = vmatprep.subr.mxu0 0.0
    %531 = vmatpush1.msra.mxu0 0.0
    %532 = vmatprep.subr.mxu0 0.0
    %533 = vmatpush1.msra.mxu0 0.0
    %534 = vmatprep.subr.mxu0 0.0
    %535 = vmatpush1.msra.mxu0 0.0
    %536 = vmatprep.subr.mxu0 0.0
    %537 = vmatpush1.msra.mxu0 0.0
    %538 = vmatprep.subr.mxu0 0.0
    %539 = vmatpush1.msra.mxu0 0.0
    %540 = vmatprep.subr.mxu0 0.0
    %541 = vmatpush1.msra.mxu0 0.0
    %542 = vmatprep.subr.mxu0 0.0
    %543 = vmatpush1.msra.mxu0 0.0
    %544 = vmatprep.subr.mxu0 0.0
    %545 = vmatpush1.msra.mxu0 0.0
    %546 = vmatprep.subr.mxu0 0.0
    %547 = vmatpush1.msra.mxu0 0.0
    %548 = vmatprep.subr.mxu0 0.0
    %549 = vmatpush1.msra.mxu0 0.0
    %550 = vmatprep.subr.mxu0 0.0
    %551 = vmatpush1.msra.mxu0 0.0
    %552 = vmatprep.subr.mxu0 0.0
    %553 = vmatpush1.msra.mxu0 0.0
    %554 = vmatprep.subr.mxu0 0.0
    %555 = vmatpush1.msra.mxu0 0.0
    %556 = vmatprep.subr.mxu0 0.0
    %557 = vmatpush1.msra.mxu0 0.0
    %558 = vmatprep.subr.mxu0 0.0
    %559 = vmatpush1.msra.mxu0 0.0
    %560 = vmatprep.subr.mxu0 0.0
    %561 = vmatpush1.msra.mxu0 0.0
    %562 = vmatprep.subr.mxu0 0.0
    %563 = vmatpush1.msra.mxu0 0.0
    %564 = vmatprep.mubr.f32.mxu0 0.0
    %565 = vmatmul.mubr.f32.gmra.mrb[0].mxu0 %v495
    %v566 = vpop.f32.mrb[0].mxu0
    %v567 = vadd.f32 0.0, %v566
    %v568 = vpop.f32.mrb[0].mxu0
    %569 = vmatprep.mubr.f32.mxu0 0.0
    %570 = vmatmul.mubr.f32.gmra.mrb[0].mxu0 %v498
    %v571 = vpop.f32.mrb[0].mxu0
    %v572 = vadd.f32 0.0, %v571
    %v573 = vpop.f32.mrb[0].mxu0
    %574 = vdwg.mxu0
    %v575 = vadd.f32 %v393, %v567
    %v576 = vadd.f32 %v398, %v572
    %v577 = vld [vmem:[%s3] sm:$0x1]
    %v579 = vlaneseq
    %v580 = vshrl.u32 %v579, 7
    %v581 = vsub.s32 0, %v580
    %v582 = vrot.slane %v577, %v581
    %v584 = vadd.f32 %v575, %v582
    %v585 = vadd.f32 %v576, %v582
    %v586 = vtanh.pop %v584
    %v587 = vtanh.pop %v585
    %v588 = vld [vmem:[%s4] sm:$0xff]
    %v589 = vld [vmem:[%s4 + $0x8] sm:$0xff]
    %v590 = vld [vmem:[%s4 + $0x10] sm:$0xff]
    %v591 = vld [vmem:[%s4 + $0x18] sm:$0xff]
    %v592 = vld [vmem:[%s4 + $0x20] sm:$0xff]
    %v593 = vld [vmem:[%s4 + $0x28] sm:$0xff]
    %v594 = vld [vmem:[%s4 + $0x30] sm:$0xff]
    %v595 = vld [vmem:[%s4 + $0x38] sm:$0xff]
    %v596 = vld [vmem:[%s4 + $0x40] sm:$0xff]
    %v597 = vld [vmem:[%s4 + $0x48] sm:$0xff]
    %v598 = vld [vmem:[%s4 + $0x50] sm:$0xff]
    %v599 = vld [vmem:[%s4 + $0x58] sm:$0xff]
    %v600 = vld [vmem:[%s4 + $0x60] sm:$0xff]
    %v601 = vld [vmem:[%s4 + $0x68] sm:$0xff]
    %v602 = vld [vmem:[%s4 + $0x70] sm:$0xff]
    %v603 = vld [vmem:[%s4 + $0x78] sm:$0xff]
    %v604 = vld [vmem:[%s5] sm:$0x1]
    %v606 = vlaneseq
    %v607 = vshrl.u32 %v606, 7
    %v608 = vsub.s32 0, %v607
    %v609 = vrot.slane %v604, %v608
    %611 = vmatprep.subr.mxu0 0.0
    %612 = vmatpush1.msra.mxu0 %v588
    %613 = vmatprep.subr.mxu0 0.0
    %614 = vmatpush1.msra.mxu0 %v589
    %615 = vmatprep.subr.mxu0 0.0
    %616 = vmatpush1.msra.mxu0 %v590
    %617 = vmatprep.subr.mxu0 0.0
    %618 = vmatpush1.msra.mxu0 %v591
    %619 = vmatprep.subr.mxu0 0.0
    %620 = vmatpush1.msra.mxu0 %v592
    %621 = vmatprep.subr.mxu0 0.0
    %622 = vmatpush1.msra.mxu0 %v593
    %623 = vmatprep.subr.mxu0 0.0
    %624 = vmatpush1.msra.mxu0 %v594
    %625 = vmatprep.subr.mxu0 0.0
    %626 = vmatpush1.msra.mxu0 %v595
    %627 = vmatprep.subr.mxu0 0.0
    %628 = vmatpush1.msra.mxu0 %v596
    %629 = vmatprep.subr.mxu0 0.0
    %630 = vmatpush1.msra.mxu0 %v597
    %631 = vmatprep.subr.mxu0 0.0
    %632 = vmatpush1.msra.mxu0 %v598
    %633 = vmatprep.subr.mxu0 0.0
    %634 = vmatpush1.msra.mxu0 %v599
    %635 = vmatprep.subr.mxu0 0.0
    %636 = vmatpush1.msra.mxu0 %v600
    %637 = vmatprep.subr.mxu0 0.0
    %638 = vmatpush1.msra.mxu0 %v601
    %639 = vmatprep.subr.mxu0 0.0
    %640 = vmatpush1.msra.mxu0 %v602
    %641 = vmatprep.subr.mxu0 0.0
    %642 = vmatpush1.msra.mxu0 %v603
    %643 = vmatprep.subr.mxu0 0.0
    %644 = vmatpush1.msra.mxu0 0.0
    %645 = vmatprep.subr.mxu0 0.0
    %646 = vmatpush1.msra.mxu0 0.0
    %647 = vmatprep.subr.mxu0 0.0
    %648 = vmatpush1.msra.mxu0 0.0
    %649 = vmatprep.subr.mxu0 0.0
    %650 = vmatpush1.msra.mxu0 0.0
    %651 = vmatprep.subr.mxu0 0.0
    %652 = vmatpush1.msra.mxu0 0.0
    %653 = vmatprep.subr.mxu0 0.0
    %654 = vmatpush1.msra.mxu0 0.0
    %655 = vmatprep.subr.mxu0 0.0
    %656 = vmatpush1.msra.mxu0 0.0
    %657 = vmatprep.subr.mxu0 0.0
    %658 = vmatpush1.msra.mxu0 0.0
    %659 = vmatprep.subr.mxu0 0.0
    %660 = vmatpush1.msra.mxu0 0.0
    %661 = vmatprep.subr.mxu0 0.0
    %662 = vmatpush1.msra.mxu0 0.0
    %663 = vmatprep.subr.mxu0 0.0
    %664 = vmatpush1.msra.mxu0 0.0
    %665 = vmatprep.subr.mxu0 0.0
    %666 = vmatpush1.msra.mxu0 0.0
    %667 = vmatprep.subr.mxu0 0.0
    %668 = vmatpush1.msra.mxu0 0.0
    %669 = vmatprep.subr.mxu0 0.0
    %670 = vmatpush1.msra.mxu0 0.0
    %671 = vmatprep.subr.mxu0 0.0
    %672 = vmatpush1.msra.mxu0 0.0
    %673 = vmatprep.subr.mxu0 0.0
    %674 = vmatpush1.msra.mxu0 0.0
    %675 = vmatprep.mubr.f32.mxu0 0.0
    %676 = vmatmul.mubr.f32.gmra.mrb[0].mxu0 %v586
    %v677 = vpop.f32.mrb[0].mxu0
    %v678 = vadd.f32 %v609, %v677
    %v679 = vpop.f32.mrb[0].mxu0
    %680 = vmatprep.mubr.f32.mxu0 0.0
    %681 = vmatmul.mubr.f32.gmra.mrb[0].mxu0 %v587
    %v682 = vpop.f32.mrb[0].mxu0
    %v683 = vadd.f32 %v609, %v682
    %v684 = vpop.f32.mrb[0].mxu0
    %685 = vdwg.mxu0
    %686 = vst [vmem:[%s6] sm:$0xff] %v678
    %687 = vst [vmem:[%s6 + $0x8] sm:$0xff] %v683
    // Predicated region
    $region30: #{mlp_forward.1} parent=1 // pred_check
      _
    $region31: #{mlp_forward.1} parent=1 // pred_check_branch
      %689 = sbr.rel (0) target = $region33
    $region32: #{mlp_forward.1} parent=1 // pred_region
      _
    $region33: #{mlp_forward.1} parent=1 // pred_fallthru
      _
    // Predicated region
    $region34: #{mlp_forward.1} parent=1 // pred_check
      _
    $region35: #{mlp_forward.1} parent=1 // pred_check_branch
      %691 = sbr.rel (0) target = $region37
    $region36: #{mlp_forward.1} parent=1 // pred_region
      _
    $region37: #{mlp_forward.1} parent=1 // pred_fallthru
      _
    %692 = vsyncpa [#allocation3], 1

</llo_original>
